<compile_context>
chip_gen: v7x
topology: tpu7x:2x2x1
jax: 0.10.0
libtpu: 0.0.40
codegen_flags: <defaults>
</compile_context>

<pallas_src>
import jax
import jax.numpy as jnp
from jax.experimental import pallas as pl
from jax.experimental.pallas import tpu as pltpu


def _round_up(n: int, m: int) -> int:
    return ((n + m - 1) // m) * m


def _choose_block(dim: int, want: int, unit: int, min_block: int):
    """Pick (block, padded_dim) for one tiled axis.

    Prefers a block that exactly divides the unit-rounded dim (zero pad
    waste).  If only tiny divisors exist, pads the dim by at most one block.
    """
    padded = _round_up(dim, unit)
    want = max(unit, min(_round_up(want, unit), padded))
    best = unit
    cand = unit
    while cand <= want:
        if padded % cand == 0:
            best = cand
        cand += unit
    if best == padded or best >= min_block:
        return best, padded
    return want, _round_up(padded, want)


def _pad2d(a, shape):
    if tuple(a.shape) == tuple(shape):
        return a
    return jnp.zeros(shape, a.dtype).at[: a.shape[0], : a.shape[1]].set(a)


def _ensemble_linear_kernel(x_ref, w_ref, b_ref, o_ref, acc_ref):
    """out = x @ W_eff + b_eff, tiled over (M, N, K) with K innermost.

    x is cast to the weight dtype (bf16) in-kernel; MXU accumulates in f32;
    the bias add / epilogue stays in f32 and is cast once on the final store.
    """
    k = pl.program_id(2)

    @pl.when(k == 0)
    def _():
        acc_ref[...] = jnp.zeros_like(acc_ref)

    acc_ref[...] += jnp.dot(
        x_ref[...].astype(w_ref.dtype),
        w_ref[...],
        preferred_element_type=jnp.float32,
    )

    @pl.when(k == pl.num_programs(2) - 1)
    def _():
        o_ref[...] = (acc_ref[...] + b_ref[...]).astype(o_ref.dtype)


def fold_ensemble_two_params(w1, b1, w2, b2, *, compute_dtype=jnp.bfloat16):
    """Algebraic fold of the two-linear ensemble (hoist out of the per-step
    jit when the weights are constant across calls)."""
    w_eff = ((w1.astype(jnp.float32) + w2.astype(jnp.float32)) * 0.5).astype(
        compute_dtype)
    b_eff = ((b1.astype(jnp.float32) + b2.astype(jnp.float32)) * 0.5).astype(
        jnp.float32)
    return w_eff, b_eff


def ensemble_two_apply(x, w_eff, b_eff, *, block_b: int = 256,
                       block_n: int = 512, block_k: int = 512,
                       out_dtype=None):
    """Apply the pre-folded ensemble linear: out = x @ w_eff + b_eff.

    x:     [B, Din]
    w_eff: [Din, Dout]   (already transposed from PyTorch's [out, in] layout)
    b_eff: [Dout]
    """
    B, Din = x.shape
    Din_w, Dout = w_eff.shape
    assert Din == Din_w, "x / w_eff contraction mismatch"
    out_dtype = x.dtype if out_dtype is None else out_dtype

    # --- tile selection (zero pad waste when possible, <= 1 tile otherwise).
    bb, Bp = _choose_block(B, block_b, unit=8, min_block=64)
    bn, Doutp = _choose_block(Dout, block_n, unit=128, min_block=256)
    bk, Dinp = _choose_block(Din, block_k, unit=128, min_block=128)

    # --- pad only when genuinely required; x stays in its native dtype and is
    #     cast to bf16 inside the kernel (avoids a wrapper-side HBM pass).
    x_in = _pad2d(x, (Bp, Dinp)) if (Bp != B or Dinp != Din) else x
    w_in = _pad2d(w_eff, (Dinp, Doutp))
    b_in = _pad2d(b_eff.reshape(1, Dout).astype(jnp.float32), (1, Doutp))

    grid = (Bp // bb, Doutp // bn, Dinp // bk)

    # --- VMEM budget for this tiling (double-buffered inputs/outputs + acc).
    xb = jnp.dtype(x_in.dtype).itemsize
    wb = jnp.dtype(w_in.dtype).itemsize
    ob = jnp.dtype(out_dtype).itemsize
    vmem_est = (2 * bb * bk * xb + 2 * bk * bn * wb + 2 * bn * 4
                + 2 * bb * bn * ob + bb * bn * 4)
    vmem_limit = int(min(max(2 * vmem_est, 16 * 2**20), 64 * 2**20))

    cost = pl.CostEstimate(
        flops=2 * B * Din * Dout,
        transcendentals=0,
        bytes_accessed=B * Din * xb + Din * Dout * wb + Dout * 4
        + B * Dout * ob,
    )

    out_p = pl.pallas_call(
        _ensemble_linear_kernel,
        out_shape=jax.ShapeDtypeStruct((Bp, Doutp), out_dtype),
        grid=grid,
        in_specs=[
            pl.BlockSpec((bb, bk), lambda i, j, k: (i, k)),
            pl.BlockSpec((bk, bn), lambda i, j, k: (k, j)),
            pl.BlockSpec((1, bn), lambda i, j, k: (0, j)),
        ],
        out_specs=pl.BlockSpec((bb, bn), lambda i, j, k: (i, j)),
        scratch_shapes=[pltpu.VMEM((bb, bn), jnp.float32)],
        compiler_params=pltpu.CompilerParams(
            dimension_semantics=("parallel", "parallel", "arbitrary"),
            vmem_limit_bytes=vmem_limit,
        ),
        cost_estimate=cost,
    )(x_in, w_in, b_in)

    if Bp != B or Doutp != Dout:
        out_p = out_p[:B, :Dout]
    return out_p


def ensemble_two_forward(x, w1, b1, w2, b2, *, block_b: int = 256,
                         block_n: int = 512, block_k: int = 512,
                         out_dtype=None, compute_dtype=jnp.bfloat16):
    """EnsembleTwo forward: (Linear1(x) + Linear2(x)) / 2.

    Weights are given already transposed to [in, out].
    """
    w_eff, b_eff = fold_ensemble_two_params(
        w1, b1, w2, b2, compute_dtype=compute_dtype)
    return ensemble_two_apply(
        x, w_eff, b_eff, block_b=block_b, block_n=block_n, block_k=block_k,
        out_dtype=out_dtype)


if __name__ == "__main__":
    # Small shapes consistent with the module: two Linear(32 -> 32) submodels.
    batch, in_features, out_features = 8, 32, 32

    key = jax.random.PRNGKey(0)
    kx, k1w, k1b, k2w, k2b = jax.random.split(key, 5)

    x = jax.random.normal(kx, (batch, in_features), dtype=jnp.float32)
    # Synthetic nn.Linear-style init, stored already transposed to [in, out].
    scale = 1.0 / jnp.sqrt(in_features)
    w1 = jax.random.uniform(k1w, (in_features, out_features), jnp.float32,
                            -scale, scale)
    b1 = jax.random.uniform(k1b, (out_features,), jnp.float32, -scale, scale)
    w2 = jax.random.uniform(k2w, (in_features, out_features), jnp.float32,
                            -scale, scale)
    b2 = jax.random.uniform(k2b, (out_features,), jnp.float32, -scale, scale)

    fwd = jax.jit(ensemble_two_forward)
    out = jax.block_until_ready(fwd(x, w1, b1, w2, b2))
    assert out.shape == (batch, out_features)
    assert out.dtype == x.dtype

    # (1) Tight check vs a reference with the same bf16 operand rounding
    #     (isolates kernel bugs from expected quantization error).
    w_eff = (w1 + w2) * 0.5
    b_eff = (b1 + b2) * 0.5
    ref_bf16 = (
        jnp.dot(
            x.astype(jnp.bfloat16).astype(jnp.float32),
            w_eff.astype(jnp.bfloat16).astype(jnp.float32),
            preferred_element_type=jnp.float32,
        )
        + b_eff
    )
    assert jnp.allclose(out, ref_bf16, atol=1e-4, rtol=1e-4), \
        "mismatch vs bf16-matched reference"

    # (2) Loose check vs the exact f32 module semantics (bf16 operand rounding
    #     is the only difference).
    ref_f32 = ((x @ w1 + b1) + (x @ w2 + b2)) * 0.5
    assert jnp.allclose(out, ref_f32, atol=1e-1, rtol=1e-1), \
        "mismatch vs f32 module reference"

    print("KERNEL_OK")
</pallas_src>

<mosaic_0001>
module attributes {stable_mosaic.version = 11 : i64} {
  func.func @_ensemble_linear_kernel(%arg0: i32, %arg1: i32, %arg2: i32, %arg3: memref<8x128xf32, #tpu.memory_space<vmem>>, %arg4: memref<128x128xbf16, #tpu.memory_space<vmem>>, %arg5: memref<1x128xf32, #tpu.memory_space<vmem>>, %arg6: memref<8x128xf32, #tpu.memory_space<vmem>>, %arg7: memref<8x128xf32, #tpu.memory_space<vmem>>) attributes {dimension_semantics = [#tpu.dimension_semantics<parallel>, #tpu.dimension_semantics<parallel>, #tpu.dimension_semantics<arbitrary>], iteration_bounds = array<i64: 1, 1, 1>, scalar_prefetch = 0 : i64, scratch_operands = 1 : i64, tpu.core_type = #tpu.core_type<tc>, window_params = [{transform_indices = @transform_0, window_bounds = array<i64: 8, 128>}, {transform_indices = @transform_1, window_bounds = array<i64: 128, 128>}, {transform_indices = @transform_2, window_bounds = array<i64: 1, 128>}, {transform_indices = @transform_3, window_bounds = array<i64: 8, 128>}]} {
    %c0_i32 = arith.constant 0 : i32
    %0 = arith.cmpi eq, %arg2, %c0_i32 : i32
    %1 = arith.extui %0 : i1 to i32
    %c0_i32_0 = arith.constant 0 : i32
    %2 = arith.cmpi ne, %1, %c0_i32_0 : i32
    scf.if %2 {
      %cst_10 = arith.constant 0.000000e+00 : f32
      %13 = vector.broadcast %cst_10 : f32 to vector<8x128xf32>
      %c0_11 = arith.constant 0 : index
      %c0_12 = arith.constant 0 : index
      %14 = vector.load %arg7[%c0_11, %c0_12] : memref<8x128xf32, #tpu.memory_space<vmem>>, vector<8x128xf32>
      tpu.vector_store %arg7[%c0_11, %c0_12], %13 {strides = array<i32>} : memref<8x128xf32, #tpu.memory_space<vmem>>, vector<8x128xf32>,
    } else {
    }
    %c0 = arith.constant 0 : index
    %c0_1 = arith.constant 0 : index
    %3 = vector.load %arg7[%c0, %c0_1] : memref<8x128xf32, #tpu.memory_space<vmem>>, vector<8x128xf32>
    %c0_2 = arith.constant 0 : index
    %c0_3 = arith.constant 0 : index
    %4 = vector.load %arg3[%c0_2, %c0_3] : memref<8x128xf32, #tpu.memory_space<vmem>>, vector<8x128xf32>
    %5 = arith.truncf %4 : vector<8x128xf32> to vector<8x128xbf16>
    %c0_4 = arith.constant 0 : index
    %c0_5 = arith.constant 0 : index
    %6 = vector.load %arg4[%c0_4, %c0_5] : memref<128x128xbf16, #tpu.memory_space<vmem>>, vector<128x128xbf16>
    %cst = arith.constant dense<0.000000e+00> : vector<8x128xf32>
    %7 = tpu.matmul %5, %6, %cst {dimension_numbers = #tpu.dot_dimension_numbers<[1], [0], [0], [1], [0, 0, 1, 1], [], []>} : vector<8x128xbf16>, vector<128x128xbf16>, vector<8x128xf32> -> vector<8x128xf32>
    %8 = arith.addf %3, %7 : vector<8x128xf32>
    %c0_6 = arith.constant 0 : index
    %c0_7 = arith.constant 0 : index
    %9 = vector.load %arg7[%c0_6, %c0_7] : memref<8x128xf32, #tpu.memory_space<vmem>>, vector<8x128xf32>
    tpu.vector_store %arg7[%c0_6, %c0_7], %8 {strides = array<i32>} : memref<8x128xf32, #tpu.memory_space<vmem>>, vector<8x128xf32>,
    %c0_i32_8 = arith.constant 0 : i32
    %10 = arith.cmpi eq, %arg2, %c0_i32_8 : i32
    %11 = arith.extui %10 : i1 to i32
    %c0_i32_9 = arith.constant 0 : i32
    %12 = arith.cmpi ne, %11, %c0_i32_9 : i32
    scf.if %12 {
      %c0_10 = arith.constant 0 : index
      %c0_11 = arith.constant 0 : index
      %13 = vector.load %arg7[%c0_10, %c0_11] : memref<8x128xf32, #tpu.memory_space<vmem>>, vector<8x128xf32>
      %c0_12 = arith.constant 0 : index
      %c0_13 = arith.constant 0 : index
      %14 = vector.load %arg5[%c0_12, %c0_13] : memref<1x128xf32, #tpu.memory_space<vmem>>, vector<1x128xf32>
      %15 = vector.broadcast %14 : vector<1x128xf32> to vector<8x128xf32>
      %16 = arith.addf %13, %15 : vector<8x128xf32>
      %c0_14 = arith.constant 0 : index
      %c0_15 = arith.constant 0 : index
      %17 = vector.load %arg6[%c0_14, %c0_15] : memref<8x128xf32, #tpu.memory_space<vmem>>, vector<8x128xf32>
      tpu.vector_store %arg6[%c0_14, %c0_15], %16 {strides = array<i32>} : memref<8x128xf32, #tpu.memory_space<vmem>>, vector<8x128xf32>,
    } else {
    }
    return
  }
  func.func @transform_0(%arg0: i32, %arg1: i32, %arg2: i32) -> (i32, i32) {
    %c0_i32 = arith.constant 0 : i32
    return %arg0, %arg2 : i32, i32
  }
  func.func @transform_1(%arg0: i32, %arg1: i32, %arg2: i32) -> (i32, i32) {
    %c0_i32 = arith.constant 0 : i32
    return %arg2, %arg1 : i32, i32
  }
  func.func @transform_2(%arg0: i32, %arg1: i32, %arg2: i32) -> (i32, i32) {
    %c0_i32 = arith.constant 0 : i32
    %c0_i32_0 = arith.constant 0 : i32
    return %c0_i32, %arg1 : i32, i32
  }
  func.func @transform_3(%arg0: i32, %arg1: i32, %arg2: i32) -> (i32, i32) {
    %c0_i32 = arith.constant 0 : i32
    return %arg0, %arg1 : i32, i32
  }
}

</mosaic_0001>

<llo_original>
// kernel: ensemble_two_forward.1
$region0: #{ensemble_two_forward.1}
  #allocation0 [shape = 'u32[]', space=smem, size = 0x4, offset = 0x4, fixed_abs, tag = 'smem constant byte address 0x4 - core index']
  #allocation1 [shape = 'u32[144,128]{1,0:T(1,128)}', space=vmem, size = 0x12000, scoped, tag = 'internal scratch']
  #allocation2 [shape = 'f32[8,128]{1,0:T(8,128)}', space=vmem, size = 0x1000, scoped, tag = 'scratch operand']
  %s0 = inlined_call_operand.vmem [shape: f32[8,128], index: 0, kind: input, shape index: {}]
  %s1 = inlined_call_operand.vmem [shape: bf16[128,128], index: 1, kind: input, shape index: {}]
  %s2 = inlined_call_operand.vmem [shape: f32[1,128], index: 2, kind: input, shape index: {}]
  %s3 = inlined_call_operand.hbm [shape: f32[8,128], index: 3, kind: output, shape index: {}]
  %s4 = sld [smem:[#allocation0]]
  $region30: #{ensemble_two_forward.1} parent=0
    _
  %s6 = ssub.s32 1, %s4
  %s7 = scalar_select 0, %s6, %s4
  $region1: #{ensemble_two_forward.1} parent=0
    #allocation3 [shape = 'u8[4096]{0}', space=vmem, size = 0x1000, scoped, tag = 'output window, operand 0, single buffered']
    #allocation4 [shape = 's32[1]{0}', space=sflag, size = 0x4, scoped, tag = 'scoped memory for ensemble_two_forward.1']
    %8 = vsyncpa [#allocation4], 0
    // Predicated region
    $region2: #{ensemble_two_forward.1} parent=1 // pred_check
      _
    $region3: #{ensemble_two_forward.1} parent=1 // pred_check_branch
      %10 = sbr.rel (0) target = $region5
    $region4: #{ensemble_two_forward.1} parent=1 // pred_region
      _
    $region5: #{ensemble_two_forward.1} parent=1 // pred_fallthru
      _
    // Predicated region
    $region6: #{ensemble_two_forward.1} parent=1 // pred_check
      _
    $region7: #{ensemble_two_forward.1} parent=1 // pred_check_branch
      %12 = sbr.rel (0) target = $region9
    $region8: #{ensemble_two_forward.1} parent=1 // pred_region
      _
    $region9: #{ensemble_two_forward.1} parent=1 // pred_fallthru
      _
    // Predicated region
    $region10: #{ensemble_two_forward.1} parent=1 // pred_check
      _
    $region11: #{ensemble_two_forward.1} parent=1 // pred_check_branch
      %14 = sbr.rel (0) target = $region13
    $region12: #{ensemble_two_forward.1} parent=1 // pred_region
      _
    $region13: #{ensemble_two_forward.1} parent=1 // pred_fallthru
      _
    %p16 = scmp.eq.s32.totalorder 0, 0
    // Predicated region
    $region14: #{ensemble_two_forward.1} parent=1 // pred_check
      %p17 = pneg %p16
    $region15: #{ensemble_two_forward.1} parent=1 // pred_check_branch
      %19 = sbr.rel (%p17) target = $region17
    $region16: #{ensemble_two_forward.1} parent=1 // pred_region
      %20 = vst [vmem:[#allocation2] sm:$0xff] 0.0
    $region17: #{ensemble_two_forward.1} parent=1 // pred_fallthru
      _
    %v21 = vld [vmem:[#allocation2] sm:$0xff]
    %v22 = vld [vmem:[%s0] sm:$0xff]
    %v23 = vpack.c.bf16 %v22, %v22
    %v24 = vld [vmem:[%s1] sm:$0xf]
    %v25 = vld [vmem:[%s1 + $0x4] sm:$0xf]
    %v26 = vld [vmem:[%s1 + $0x8] sm:$0xf]
    %v27 = vld [vmem:[%s1 + $0xc] sm:$0xf]
    %v28 = vld [vmem:[%s1 + $0x10] sm:$0xf]
    %v29 = vld [vmem:[%s1 + $0x14] sm:$0xf]
    %v30 = vld [vmem:[%s1 + $0x18] sm:$0xf]
    %v31 = vld [vmem:[%s1 + $0x1c] sm:$0xf]
    %v32 = vld [vmem:[%s1 + $0x20] sm:$0xf]
    %v33 = vld [vmem:[%s1 + $0x24] sm:$0xf]
    %v34 = vld [vmem:[%s1 + $0x28] sm:$0xf]
    %v35 = vld [vmem:[%s1 + $0x2c] sm:$0xf]
    %v36 = vld [vmem:[%s1 + $0x30] sm:$0xf]
    %v37 = vld [vmem:[%s1 + $0x34] sm:$0xf]
    %v38 = vld [vmem:[%s1 + $0x38] sm:$0xf]
    %v39 = vld [vmem:[%s1 + $0x3c] sm:$0xf]
    %v56 = vunpack.c.l.b16 %v24
    %v57 = vunpack.c.l.b16 %v25
    %v58 = vunpack.c.l.b16 %v26
    %v59 = vunpack.c.l.b16 %v27
    %v60 = vunpack.c.l.b16 %v28
    %v61 = vunpack.c.l.b16 %v29
    %v62 = vunpack.c.l.b16 %v30
    %v63 = vunpack.c.l.b16 %v31
    %v64 = vunpack.c.l.b16 %v32
    %v65 = vunpack.c.l.b16 %v33
    %v66 = vunpack.c.l.b16 %v34
    %v67 = vunpack.c.l.b16 %v35
    %v68 = vunpack.c.l.b16 %v36
    %v69 = vunpack.c.l.b16 %v37
    %v70 = vunpack.c.l.b16 %v38
    %v71 = vunpack.c.l.b16 %v39
    %v72 = vpack.c.b16 %v57, %v56
    %v73 = vpack.c.b16 %v59, %v58
    %v74 = vpack.c.b16 %v61, %v60
    %v75 = vpack.c.b16 %v63, %v62
    %v76 = vpack.c.b16 %v65, %v64
    %v77 = vpack.c.b16 %v67, %v66
    %v78 = vpack.c.b16 %v69, %v68
    %v79 = vpack.c.b16 %v71, %v70
    %88 = vmatprep.subr.bf16.mxu0 0
    %89 = vmatpush1.bf16.msra.mxu0 %v72
    %90 = vmatprep.subr.bf16.mxu0 0
    %91 = vmatpush1.bf16.msra.mxu0 %v73
    %92 = vmatprep.subr.bf16.mxu0 0
    %93 = vmatpush1.bf16.msra.mxu0 %v74
    %94 = vmatprep.subr.bf16.mxu0 0
    %95 = vmatpush1.bf16.msra.mxu0 %v75
    %96 = vmatprep.subr.bf16.mxu0 0
    %97 = vmatpush1.bf16.msra.mxu0 %v76
    %98 = vmatprep.subr.bf16.mxu0 0
    %99 = vmatpush1.bf16.msra.mxu0 %v77
    %100 = vmatprep.subr.bf16.mxu0 0
    %101 = vmatpush1.bf16.msra.mxu0 %v78
    %102 = vmatprep.subr.bf16.mxu0 0
    %103 = vmatpush1.bf16.msra.mxu0 %v79
    %104 = vmatprep.subr.bf16.mxu0 0
    %105 = vmatpush1.bf16.msra.mxu0 0
    %106 = vmatprep.subr.bf16.mxu0 0
    %107 = vmatpush1.bf16.msra.mxu0 0
    %108 = vmatprep.subr.bf16.mxu0 0
    %109 = vmatpush1.bf16.msra.mxu0 0
    %110 = vmatprep.subr.bf16.mxu0 0
    %111 = vmatpush1.bf16.msra.mxu0 0
    %112 = vmatprep.subr.bf16.mxu0 0
    %113 = vmatpush1.bf16.msra.mxu0 0
    %114 = vmatprep.subr.bf16.mxu0 0
    %115 = vmatpush1.bf16.msra.mxu0 0
    %116 = vmatprep.subr.bf16.mxu0 0
    %117 = vmatpush1.bf16.msra.mxu0 0
    %118 = vmatprep.subr.bf16.mxu0 0
    %119 = vmatpush1.bf16.msra.mxu0 0
    %120 = vmatprep.mubr.bf16.mxu0 0
    %121 = vmatmul.mubr.bf16.gmra.mrb[0].mxu0 %v23
    %v122 = vpop.f32.mrb[0].mxu0
    %v123 = vadd.f32 0.0, %v122
    %v124 = vpop.f32.mrb[0].mxu0
    %v125 = vpop.f32.mrb[0].mxu0
    %v126 = vpop.f32.mrb[0].mxu0
    %127 = vdwg.mxu0
    %v128 = vadd.f32 %v21, %v123
    %129 = vst [vmem:[#allocation2] sm:$0xff] %v128
    // Predicated region
    $region18: #{ensemble_two_forward.1} parent=1 // pred_check
      %p130 = pneg %p16
    $region19: #{ensemble_two_forward.1} parent=1 // pred_check_branch
      %132 = sbr.rel (%p130) target = $region21
    $region20: #{ensemble_two_forward.1} parent=1 // pred_region
      %v133 = vld [vmem:[#allocation2] sm:$0xff]
      %v134 = vld [vmem:[%s2] sm:$0x1]
      %v136 = vlaneseq
      %v137 = vshrl.u32 %v136, 7
      %v138 = vsub.s32 0, %v137
      %v139 = vrot.slane %v134, %v138
      %v141 = vadd.f32 %v133, %v139
      %142 = vst [vmem:[#allocation3] sm:$0xff] %v141
    $region21: #{ensemble_two_forward.1} parent=1 // pred_fallthru
      _
    // Predicated region
    $region22: #{ensemble_two_forward.1} parent=1 // pred_check
      _
    $region23: #{ensemble_two_forward.1} parent=1 // pred_check_branch
      %144 = sbr.rel (0) target = $region25
    $region24: #{ensemble_two_forward.1} parent=1 // pred_region
      %s146 = ssub.s32 128, 128
      %147 = vsyncadd [#allocation4], %s146
      %s149 = sshll.u32 [#allocation3], 4
      %s150 = int_to_ptr.vmem [resolvable:$true] %s149
      %152 = dma.vmem_to_hbm [thread:$0]  %s150, 128, %s3, [#allocation4]
    $region25: #{ensemble_two_forward.1} parent=1 // pred_fallthru
      _
    // Predicated region
    $region26: #{ensemble_two_forward.1} parent=1 // pred_check
      _
    $region27: #{ensemble_two_forward.1} parent=1 // pred_check_branch
      %154 = sbr.rel (0) target = $region29
    $region28: #{ensemble_two_forward.1} parent=1 // pred_region
      %155 = dma.done [#allocation4], 128
    $region29: #{ensemble_two_forward.1} parent=1 // pred_fallthru
      _
    %156 = vsyncpa [#allocation4], 1

</llo_original>
